<compile_context>
chip_gen: v5e
topology: v5e:2x2
jax: 0.10.0
libtpu: 0.0.40
codegen_flags: <defaults>
</compile_context>

<pallas_src>
import functools

import jax
import jax.numpy as jnp
from jax.experimental import pallas as pl
from jax.experimental.pallas import tpu as pltpu


def _round_up(x, m):
    return ((x + m - 1) // m) * m


def _attention_kernel(x_ref, mask_ref, w1_ref, b1_ref, w2_ref, out_ref):
    # Block shapes (all static):
    #   x_ref    : (TB, S, D) f32
    #   mask_ref : (TB, S)    int32   (1 = keep, 0 = mask out)
    #   w1_ref   : (D, H)     f32     (W1 transposed)
    #   b1_ref   : (1, H)     f32
    #   w2_ref   : (1, H)     f32
    #   out_ref  : (TB, D)    f32
    tb, S, D = x_ref.shape
    H = w1_ref.shape[1]

    x = x_ref[...]                                    # (TB, S, D)
    x2d = x.reshape(tb * S, D)                        # minor dim preserved -> cheap

    # linear1 + tanh: one big MXU matmul over all TB*S rows (tanh goes to the EUP).
    h = jnp.tanh(
        jnp.dot(x2d, w1_ref[...], preferred_element_type=jnp.float32)
        + b1_ref[...]
    )                                                 # (TB*S, H)

    # linear2 (out_features = 1): reduce over H, laid out as dense (TB, S).
    h3 = h.reshape(tb, S, H)
    logits = jnp.sum(h3 * w2_ref[...], axis=-1)       # (TB, S)
    # (b2 omitted: adding the same scalar to every seq position is a softmax no-op.)

    # masked fill with -inf (same semantics as the PyTorch masked assignment).
    logits = jnp.where(mask_ref[...] > 0, logits, -jnp.inf)

    # softmax over the seq axis (last axis here => dense lane reductions).
    m = jnp.max(logits, axis=-1, keepdims=True)       # (TB, 1)
    e = jnp.exp(logits - m)                           # (TB, S)
    score = e * pl.reciprocal(jnp.sum(e, axis=-1, keepdims=True))  # (TB, S)

    # weighted sum of X over seq: batched (TB, 1, S) @ (TB, S, D) -> (TB, 1, D) on MXU.
    out = jnp.einsum(
        "tqs,tsd->tqd",
        score.reshape(tb, 1, S),
        x,
        preferred_element_type=jnp.float32,
    )
    out_ref[...] = out.reshape(tb, D).astype(out_ref.dtype)


@functools.partial(jax.jit, static_argnames=("block_b",))
def attention_forward(x, mask, w1, b1, w2, b2=None, *, block_b=128):
    """x: (B, S, D); mask: (B, S) or (B, S, 1) bool; w1: (H, D); b1: (H,); w2: (1, H); b2: (1,).

    b2 is accepted for API parity but mathematically cannot affect the output
    (softmax over the seq axis is shift-invariant), so it is not used.
    """
    B, S, D = x.shape
    H = w1.shape[0]

    x = x.astype(jnp.float32)
    mask_i = mask.reshape(B, S).astype(jnp.int32)
    w1_t = jnp.transpose(w1).astype(jnp.float32)      # (D, H)
    b1_r = b1.reshape(1, H).astype(jnp.float32)
    w2_r = w2.reshape(1, H).astype(jnp.float32)

    # Batch-block size: >= 8 (sublane-dense output), multiple of 8, capped by block_b.
    tb = min(block_b, _round_up(B, 8))
    tb = max(8, (tb // 8) * 8)
    b_pad = _round_up(B, tb)
    if b_pad != B:
        x = jnp.pad(x, ((0, b_pad - B), (0, 0), (0, 0)))
        # Padded rows are marked fully valid so the softmax stays finite (output sliced off).
        mask_i = jnp.pad(mask_i, ((0, b_pad - B), (0, 0)), constant_values=1)

    grid = (b_pad // tb,)

    cost = pl.CostEstimate(
        flops=2 * b_pad * S * D * H + 2 * b_pad * S * H + 2 * b_pad * S * D,
        transcendentals=b_pad * S * (H + 1),          # tanh + exp
        bytes_accessed=4 * (b_pad * S * D + b_pad * S + b_pad * D + D * H + 2 * H),
    )

    out = pl.pallas_call(
        _attention_kernel,
        out_shape=jax.ShapeDtypeStruct((b_pad, D), jnp.float32),
        grid_spec=pltpu.PrefetchScalarGridSpec(
            num_scalar_prefetch=0,
            grid=grid,
            in_specs=[
                pl.BlockSpec((tb, S, D), lambda b: (b, 0, 0)),  # X      (per batch block)
                pl.BlockSpec((tb, S), lambda b: (b, 0)),        # mask   (per batch block)
                pl.BlockSpec((D, H), lambda b: (0, 0)),         # W1^T   (replicated)
                pl.BlockSpec((1, H), lambda b: (0, 0)),         # b1
                pl.BlockSpec((1, H), lambda b: (0, 0)),         # W2
            ],
            out_specs=pl.BlockSpec((tb, D), lambda b: (b, 0)),
        ),
        compiler_params=pltpu.CompilerParams(
            dimension_semantics=("parallel",),
            vmem_limit_bytes=32 * 1024 * 1024,
        ),
        cost_estimate=cost,
    )(x, mask_i, w1_t, b1_r, w2_r)
    return out[:B]


def reference_forward(x, mask, w1, b1, w2, b2):
    """Plain-JAX reference mirroring the PyTorch forward (b2 included)."""
    m = jnp.tanh(jnp.einsum("bsd,hd->bsh", x, w1) + b1)          # (B, S, H)
    m = jnp.einsum("bsh,oh->bso", m, w2) + b2                    # (B, S, 1)
    m = jnp.where(mask.reshape(mask.shape[0], -1)[..., None], m, -jnp.inf)
    score = jax.nn.softmax(m, axis=1)
    return jnp.sum(score * x, axis=1)


if __name__ == "__main__":
    # Small shapes consistent with the module: B=2, seq=8, input_size=32, hidden=32
    B, S, D, H = 2, 8, 32, 32
    key = jax.random.PRNGKey(0)
    k_x, k_w1, k_b1, k_w2, k_b2 = jax.random.split(key, 5)

    x = jax.random.normal(k_x, (B, S, D), dtype=jnp.float32)

    # Deterministic parameter init mimicking the module's __init__:
    #   xavier_normal_ for weights, PyTorch Linear default uniform for biases.
    w1 = jax.random.normal(k_w1, (H, D), dtype=jnp.float32) * jnp.sqrt(2.0 / (D + H))
    b1 = jax.random.uniform(k_b1, (H,), minval=-1.0 / jnp.sqrt(D),
                            maxval=1.0 / jnp.sqrt(D), dtype=jnp.float32)
    w2 = jax.random.normal(k_w2, (1, H), dtype=jnp.float32) * jnp.sqrt(2.0 / (H + 1))
    b2 = jax.random.uniform(k_b2, (1,), minval=-1.0 / jnp.sqrt(H),
                            maxval=1.0 / jnp.sqrt(H), dtype=jnp.float32)

    # Boolean mask: batch 0 fully valid, batch 1 only first 5 positions valid.
    lengths = jnp.array([8, 5])
    mask = jnp.arange(S)[None, :] < lengths[:, None]             # (B, S) bool

    out = attention_forward(x, mask, w1, b1, w2, b2)
    out = jax.block_until_ready(out)

    ref = reference_forward(x, mask, w1, b1, w2, b2)
    assert out.shape == (B, D)
    assert jnp.allclose(out, ref, atol=1e-5, rtol=1e-5), "mismatch vs. reference"

    print("KERNEL_OK")
</pallas_src>

<mosaic_0001>
module attributes {stable_mosaic.version = 11 : i64} {
  func.func @_attention_kernel(%arg0: i32, %arg1: memref<8x8x32xf32, #tpu.memory_space<vmem>>, %arg2: memref<8x8xi32, #tpu.memory_space<vmem>>, %arg3: memref<32x32xf32, #tpu.memory_space<vmem>>, %arg4: memref<1x32xf32, #tpu.memory_space<vmem>>, %arg5: memref<1x32xf32, #tpu.memory_space<vmem>>, %arg6: memref<8x32xf32, #tpu.memory_space<vmem>>) attributes {dimension_semantics = [#tpu.dimension_semantics<parallel>], iteration_bounds = array<i64: 1>, scalar_prefetch = 0 : i64, scratch_operands = 0 : i64, tpu.core_type = #tpu.core_type<tc>, window_params = [{transform_indices = @transform_0, window_bounds = array<i64: 8, 8, 32>}, {transform_indices = @transform_1, window_bounds = array<i64: 8, 8>}, {pipeline_mode = #tpu.pipeline_mode<synchronous>, transform_indices = @transform_2, window_bounds = array<i64: 32, 32>}, {pipeline_mode = #tpu.pipeline_mode<synchronous>, transform_indices = @transform_3, window_bounds = array<i64: 1, 32>}, {pipeline_mode = #tpu.pipeline_mode<synchronous>, transform_indices = @transform_4, window_bounds = array<i64: 1, 32>}, {transform_indices = @transform_5, window_bounds = array<i64: 8, 32>}]} {
    %c0 = arith.constant 0 : index
    %c0_0 = arith.constant 0 : index
    %c0_1 = arith.constant 0 : index
    %0 = vector.load %arg1[%c0, %c0_0, %c0_1] : memref<8x8x32xf32, #tpu.memory_space<vmem>>, vector<8x8x32xf32>
    %1 = vector.shape_cast %0 : vector<8x8x32xf32> to vector<64x32xf32>
    %c0_2 = arith.constant 0 : index
    %c0_3 = arith.constant 0 : index
    %2 = vector.load %arg3[%c0_2, %c0_3] : memref<32x32xf32, #tpu.memory_space<vmem>>, vector<32x32xf32>
    %cst = arith.constant dense<0.000000e+00> : vector<64x32xf32>
    %3 = tpu.matmul %1, %2, %cst {dimension_numbers = #tpu.dot_dimension_numbers<[1], [0], [0], [1], [0, 0, 1, 1], [], []>} : vector<64x32xf32>, vector<32x32xf32>, vector<64x32xf32> -> vector<64x32xf32>
    %c0_4 = arith.constant 0 : index
    %c0_5 = arith.constant 0 : index
    %4 = vector.load %arg4[%c0_4, %c0_5] : memref<1x32xf32, #tpu.memory_space<vmem>>, vector<1x32xf32>
    %5 = vector.broadcast %4 : vector<1x32xf32> to vector<64x32xf32>
    %6 = arith.addf %3, %5 : vector<64x32xf32>
    %7 = math.tanh %6 : vector<64x32xf32>
    %8 = vector.shape_cast %7 : vector<64x32xf32> to vector<8x8x32xf32>
    %c0_6 = arith.constant 0 : index
    %c0_7 = arith.constant 0 : index
    %9 = vector.load %arg5[%c0_6, %c0_7] : memref<1x32xf32, #tpu.memory_space<vmem>>, vector<1x32xf32>
    %10 = vector.shape_cast %9 : vector<1x32xf32> to vector<1x1x32xf32>
    %11 = vector.broadcast %10 : vector<1x1x32xf32> to vector<8x8x32xf32>
    %12 = arith.mulf %8, %11 : vector<8x8x32xf32>
    %cst_8 = arith.constant dense<0.000000e+00> : vector<8x8xf32>
    %13 = vector.multi_reduction <add>, %12, %cst_8 [2] : vector<8x8x32xf32> to vector<8x8xf32>
    %c0_9 = arith.constant 0 : index
    %c0_10 = arith.constant 0 : index
    %14 = vector.load %arg2[%c0_9, %c0_10] : memref<8x8xi32, #tpu.memory_space<vmem>>, vector<8x8xi32>
    %c0_i32 = arith.constant 0 : i32
    %15 = vector.broadcast %c0_i32 : i32 to vector<8x8xi32>
    %16 = arith.cmpi sgt, %14, %15 : vector<8x8xi32>
    %cst_11 = arith.constant 0xFF800000 : f32
    %17 = vector.broadcast %cst_11 : f32 to vector<8x8xf32>
    %18 = arith.select %16, %13, %17 : vector<8x8xi1>, vector<8x8xf32>
    %cst_12 = arith.constant dense<0xFF800000> : vector<8xf32>
    %19 = vector.multi_reduction <maximumf>, %18, %cst_12 [1] : vector<8x8xf32> to vector<8xf32>
    %20 = vector.shape_cast %19 : vector<8xf32> to vector<8x1xf32>
    %21 = vector.broadcast %20 : vector<8x1xf32> to vector<8x8xf32>
    %22 = arith.subf %18, %21 : vector<8x8xf32>
    %23 = math.exp %22 : vector<8x8xf32>
    %cst_13 = arith.constant dense<0.000000e+00> : vector<8xf32>
    %24 = vector.multi_reduction <add>, %23, %cst_13 [1] : vector<8x8xf32> to vector<8xf32>
    %25 = vector.shape_cast %24 : vector<8xf32> to vector<8x1xf32>
    %26 = tpu.reciprocal %25 : vector<8x1xf32> -> vector<8x1xf32>
    %27 = vector.broadcast %26 : vector<8x1xf32> to vector<8x8xf32>
    %28 = arith.mulf %23, %27 : vector<8x8xf32>
    %29 = vector.shape_cast %28 : vector<8x8xf32> to vector<8x1x8xf32>
    "tpu.trace_start"() <{level = 10 : i32, message = "tqs,tsd->tqd"}> : () -> ()
    %cst_14 = arith.constant dense<0.000000e+00> : vector<8x1x32xf32>
    %30 = tpu.matmul %29, %0, %cst_14 {dimension_numbers = #tpu.dot_dimension_numbers<[2], [1], [1], [2], [0, 0, 0, 1, 1, 2], [0], [0]>} : vector<8x1x8xf32>, vector<8x8x32xf32>, vector<8x1x32xf32> -> vector<8x1x32xf32>
    "tpu.trace_stop"() : () -> ()
    %31 = vector.shape_cast %30 : vector<8x1x32xf32> to vector<8x32xf32>
    %c0_15 = arith.constant 0 : index
    %c0_16 = arith.constant 0 : index
    %32 = vector.load %arg6[%c0_15, %c0_16] : memref<8x32xf32, #tpu.memory_space<vmem>>, vector<8x32xf32>
    tpu.vector_store %arg6[%c0_15, %c0_16], %31 {strides = array<i32>} : memref<8x32xf32, #tpu.memory_space<vmem>>, vector<8x32xf32>,
    return
  }
  func.func @transform_0(%arg0: i32) -> (i32, i32, i32) {
    %c0_i32 = arith.constant 0 : i32
    %c0_i32_0 = arith.constant 0 : i32
    %c0_i32_1 = arith.constant 0 : i32
    return %arg0, %c0_i32, %c0_i32_0 : i32, i32, i32
  }
  func.func @transform_1(%arg0: i32) -> (i32, i32) {
    %c0_i32 = arith.constant 0 : i32
    %c0_i32_0 = arith.constant 0 : i32
    return %arg0, %c0_i32 : i32, i32
  }
  func.func @transform_2(%arg0: i32) -> (i32, i32) {
    %c0_i32 = arith.constant 0 : i32
    %c0_i32_0 = arith.constant 0 : i32
    %c0_i32_1 = arith.constant 0 : i32
    return %c0_i32, %c0_i32_0 : i32, i32
  }
  func.func @transform_3(%arg0: i32) -> (i32, i32) {
    %c0_i32 = arith.constant 0 : i32
    %c0_i32_0 = arith.constant 0 : i32
    %c0_i32_1 = arith.constant 0 : i32
    return %c0_i32, %c0_i32_0 : i32, i32
  }
  func.func @transform_4(%arg0: i32) -> (i32, i32) {
    %c0_i32 = arith.constant 0 : i32
    %c0_i32_0 = arith.constant 0 : i32
    %c0_i32_1 = arith.constant 0 : i32
    return %c0_i32, %c0_i32_0 : i32, i32
  }
  func.func @transform_5(%arg0: i32) -> (i32, i32) {
    %c0_i32 = arith.constant 0 : i32
    %c0_i32_0 = arith.constant 0 : i32
    return %arg0, %c0_i32 : i32, i32
  }
}

</mosaic_0001>

<llo_original>
// kernel: attention_forward.1
$region0: #{attention_forward.1}
  #allocation0 [shape = 'u32[]', space=smem, size = 0x4, offset = 0x4, fixed_abs, tag = 'smem constant byte address 0x4 - core index']
  #allocation1 [shape = 'u32[72,128]{1,0:T(1,128)}', space=vmem, size = 0x9000, scoped, tag = 'internal scratch']
  %s0 = inlined_call_operand.vmem [shape: f32[8,8,32], index: 0, kind: input, shape index: {}]
  %s1 = inlined_call_operand.vmem [shape: s32[8,8], index: 1, kind: input, shape index: {}]
  %s2 = inlined_call_operand.vmem [shape: f32[32,32], index: 2, kind: input, shape index: {}]
  %s3 = inlined_call_operand.vmem [shape: f32[1,32], index: 3, kind: input, shape index: {}]
  %s4 = inlined_call_operand.vmem [shape: f32[1,32], index: 4, kind: input, shape index: {}]
  %s5 = inlined_call_operand.vmem [shape: f32[8,32], index: 5, kind: output, shape index: {}]
  %s6 = sld [smem:[#allocation0]]
  $region30: #{attention_forward.1} parent=0
    _
  %s8 = ssub.s32 1, %s6
  %s9 = scalar_select 0, %s8, %s6
  // Predicated region
  $region2: #{attention_forward.1} parent=0 // pred_check
    _
  $region3: #{attention_forward.1} parent=0 // pred_check_branch
    %11 = sbr.rel (0) target = $region5
  $region4: #{attention_forward.1} parent=0 // pred_region
    _
  $region5: #{attention_forward.1} parent=0 // pred_fallthru
    _
  // Predicated region
  $region6: #{attention_forward.1} parent=0 // pred_check
    _
  $region7: #{attention_forward.1} parent=0 // pred_check_branch
    %13 = sbr.rel (0) target = $region9
  $region8: #{attention_forward.1} parent=0 // pred_region
    _
  $region9: #{attention_forward.1} parent=0 // pred_fallthru
    _
  // Predicated region
  $region10: #{attention_forward.1} parent=0 // pred_check
    _
  $region11: #{attention_forward.1} parent=0 // pred_check_branch
    %15 = sbr.rel (0) target = $region13
  $region12: #{attention_forward.1} parent=0 // pred_region
    _
  $region13: #{attention_forward.1} parent=0 // pred_fallthru
    _
  // Predicated region
  $region14: #{attention_forward.1} parent=0 // pred_check
    _
  $region15: #{attention_forward.1} parent=0 // pred_check_branch
    %17 = sbr.rel (0) target = $region17
  $region16: #{attention_forward.1} parent=0 // pred_region
    _
  $region17: #{attention_forward.1} parent=0 // pred_fallthru
    _
  // Predicated region
  $region18: #{attention_forward.1} parent=0 // pred_check
    _
  $region19: #{attention_forward.1} parent=0 // pred_check_branch
    %19 = sbr.rel (0) target = $region21
  $region20: #{attention_forward.1} parent=0 // pred_region
    _
  $region21: #{attention_forward.1} parent=0 // pred_fallthru
    _
  %v20 = vld [vmem:[%s0] sm:$0xff]
  %v21 = vld [vmem:[%s0 + $0x8] sm:$0xff]
  %v22 = vld [vmem:[%s0 + $0x10] sm:$0xff]
  %v23 = vld [vmem:[%s0 + $0x18] sm:$0xff]
  %v24 = vld [vmem:[%s0 + $0x20] sm:$0xff]
  %v25 = vld [vmem:[%s0 + $0x28] sm:$0xff]
  %v26 = vld [vmem:[%s0 + $0x30] sm:$0xff]
  %v27 = vld [vmem:[%s0 + $0x38] sm:$0xff]
  %v28 = vld [vmem:[%s2] sm:$0xff]
  %v29 = vld [vmem:[%s2 + $0x8] sm:$0xff]
  %v30 = vld [vmem:[%s2 + $0x10] sm:$0xff]
  %v31 = vld [vmem:[%s2 + $0x18] sm:$0xff]
  %v32 = vld [vmem:[%s3] sm:$0x1]
  %v34 = vperm.slane %v32, 0
  %vm36 = vcmask 261120
  %v38 = vsel %vm36, %v20, 0
  %v41 = vsel %vm36, %v21, 0
  %v44 = vsel %vm36, %v22, 0
  %v47 = vsel %vm36, %v23, 0
  %v50 = vsel %vm36, %v24, 0
  %v53 = vsel %vm36, %v25, 0
  %v56 = vsel %vm36, %v26, 0
  %v59 = vsel %vm36, %v27, 0
  %61 = vmatpush.msra.mxu0 0.0
  %62 = vmatpush.msra.mxu0 0.0
  %63 = vmatpush.msra.mxu0 0.0
  %64 = vmatpush.msra.mxu0 0.0
  %65 = vmatpush.msra.mxu0 0.0
  %66 = vmatpush.msra.mxu0 0.0
  %67 = vmatpush.msra.mxu0 0.0
  %68 = vmatpush.msra.mxu0 0.0
  %69 = vmatpush.msra.mxu0 0.0
  %70 = vmatpush.msra.mxu0 0.0
  %71 = vmatpush.msra.mxu0 0.0
  %72 = vmatpush.msra.mxu0 0.0
  %73 = vmatpush.msra.mxu0 %v31
  %74 = vmatpush.msra.mxu0 %v30
  %75 = vmatpush.msra.mxu0 %v29
  %76 = vmatpush.msra.mxu0 %v28
  %77 = vmatmul.f32.gmra.mxu0 %v38
  %v78 = vpop.f32.mrf.mxu0
  %v79 = vadd.f32 %v34, %v78
  %80 = vmatmul.f32.gmra.mxu0 %v41
  %v81 = vpop.f32.mrf.mxu0
  %v82 = vadd.f32 %v34, %v81
  %83 = vmatmul.f32.gmra.mxu0 %v44
  %v84 = vpop.f32.mrf.mxu0
  %v85 = vadd.f32 %v34, %v84
  %86 = vmatmul.f32.gmra.mxu0 %v47
  %v87 = vpop.f32.mrf.mxu0
  %v88 = vadd.f32 %v34, %v87
  %89 = vmatmul.f32.gmra.mxu0 %v50
  %v90 = vpop.f32.mrf.mxu0
  %v91 = vadd.f32 %v34, %v90
  %92 = vmatmul.f32.gmra.mxu0 %v53
  %v93 = vpop.f32.mrf.mxu0
  %v94 = vadd.f32 %v34, %v93
  %95 = vmatmul.f32.gmra.mxu0 %v56
  %v96 = vpop.f32.mrf.mxu0
  %v97 = vadd.f32 %v34, %v96
  %98 = vmatmul.f32.gmra.mxu0 %v59
  %v99 = vpop.f32.mrf.mxu0
  %v100 = vadd.f32 %v34, %v99
  %101 = vdwg.mxu0
  %v102 = vtanh.pop %v79
  %v103 = vtanh.pop %v82
  %v104 = vtanh.pop %v85
  %v105 = vtanh.pop %v88
  %v106 = vtanh.pop %v91
  %v107 = vtanh.pop %v94
  %v108 = vtanh.pop %v97
  %v109 = vtanh.pop %v100
  %v110 = vld [vmem:[%s4] sm:$0x1]
  %v112 = vperm.slane %v110, 0
  %v114 = vmul.f32 %v102, %v112
  %v115 = vmul.f32 %v103, %v112
  %v116 = vmul.f32 %v104, %v112
  %v117 = vmul.f32 %v105, %v112
  %v118 = vmul.f32 %v106, %v112
  %v119 = vmul.f32 %v107, %v112
  %v120 = vmul.f32 %v108, %v112
  %v121 = vmul.f32 %v109, %v112
  %v122 = vsel %vm36, %v114, 0.0
  %123 = vadd.xlane.f32.xlu0 %v122
  %v124 = vpop.xlane.xlu0 %123
  %v125 = vsel %vm36, %v115, 0.0
  %126 = vadd.xlane.f32.xlu0 %v125
  %v127 = vpop.xlane.xlu0 %126
  %v128 = vsel %vm36, %v116, 0.0
  %129 = vadd.xlane.f32.xlu0 %v128
  %v130 = vpop.xlane.xlu0 %129
  %v131 = vsel %vm36, %v117, 0.0
  %132 = vadd.xlane.f32.xlu0 %v131
  %v133 = vpop.xlane.xlu0 %132
  %v134 = vsel %vm36, %v118, 0.0
  %135 = vadd.xlane.f32.xlu0 %v134
  %v136 = vpop.xlane.xlu0 %135
  %v137 = vsel %vm36, %v119, 0.0
  %138 = vadd.xlane.f32.xlu0 %v137
  %v139 = vpop.xlane.xlu0 %138
  %v140 = vsel %vm36, %v120, 0.0
  %141 = vadd.xlane.f32.xlu0 %v140
  %v142 = vpop.xlane.xlu0 %141
  %v143 = vsel %vm36, %v121, 0.0
  %144 = vadd.xlane.f32.xlu0 %v143
  %v145 = vpop.xlane.xlu0 %144
  %v146 = vld [vmem:[%s1] sm:$0xff]
  %vm147 = vcmp.gt.s32.totalorder %v146, 0
  %v156 = vlaneseq
  %v157 = vand.u32 %v156, 127
  %v158 = vperm.slane %v124, %v157
  %v159 = vperm.slane %v127, %v157
  %v160 = vperm.slane %v130, %v157
  %v161 = vperm.slane %v133, %v157
  %v162 = vperm.slane %v136, %v157
  %v163 = vperm.slane %v139, %v157
  %v164 = vperm.slane %v142, %v157
  %v165 = vperm.slane %v145, %v157
  %vm166 = vcmask 1041409
  %v167 = vsel %vm166, %v159, %v158
  %vm168 = vcmask 1042434
  %v169 = vsel %vm168, %v160, %v167
  %vm170 = vcmask 1043459
  %v171 = vsel %vm170, %v161, %v169
  %vm172 = vcmask 1044484
  %v173 = vsel %vm172, %v162, %v171
  %vm174 = vcmask 1045509
  %v175 = vsel %vm174, %v163, %v173
  %vm176 = vcmask 1046534
  %v177 = vsel %vm176, %v164, %v175
  %vm178 = vcmask 1047559
  %v179 = vsel %vm178, %v165, %v177
  %v181 = vsel %vm147, %v179, -inf
  %vm182 = vcmask 64512
  %v183 = vsel %vm182, %v181, -inf
  %184 = vmax.xlane.f32.xlu0 %v183
  %v185 = vpop.xlane.xlu0 %184
  %v186 = vsub.f32 %v181, %v185
  %v187 = vmul.f32 %v186, 1.442695
  %v188 = vpow.pop %v187
  %v189 = vsel %vm182, %v188, 0.0
  %190 = vadd.xlane.f32.xlu0 %v189
  %v191 = vpop.xlane.xlu0 %190
  %v192 = vrcp.pop %v191
  %v193 = vmul.f32 %v191, %v192
  %v194 = vsub.f32 1.0, %v193
  %v195 = vmul.f32 %v192, %v194
  %v196 = vadd.f32 %v192, %v195
  %vm197 = vweird.f32 %v191
  %vm198 = vweird.f32 %v192
  %vm199 = vmor %vm197, %vm198
  %v200 = vsel %vm199, %v192, %v196
  %v201 = vand.u32 2147483647, %v191
  %vm202 = vcmp.eq.f32.partialorder %v201, 8.507059e+37
  %v203 = vand.u32 %v191, 2147483648
  %v204 = vor.u32 1.1754944e-38, %v203
  %v205 = vsel %vm202, %v204, %v200
  %v206 = vmul.f32 %v188, %v205
  %v208 = vrot.slane %v206, 1
  %v209 = vrot.slane %v206, 2
  %v210 = vrot.slane %v206, 3
  %v211 = vrot.slane %v206, 4
  %v212 = vrot.slane %v206, 5
  %v213 = vrot.slane %v206, 6
  %v214 = vrot.slane %v206, 7
  %v215 = vsel %vm182, %v206, 0
  %217 = vmatpush.msra.mxu0 0.0
  %218 = vmatpush.msra.mxu0 0.0
  %219 = vmatpush.msra.mxu0 0.0
  %220 = vmatpush.msra.mxu0 0.0
  %221 = vmatpush.msra.mxu0 0.0
  %222 = vmatpush.msra.mxu0 0.0
  %223 = vmatpush.msra.mxu0 0.0
  %224 = vmatpush.msra.mxu0 0.0
  %225 = vmatpush.msra.mxu0 0.0
  %226 = vmatpush.msra.mxu0 0.0
  %227 = vmatpush.msra.mxu0 0.0
  %228 = vmatpush.msra.mxu0 0.0
  %229 = vmatpush.msra.mxu0 0.0
  %230 = vmatpush.msra.mxu0 0.0
  %231 = vmatpush.msra.mxu0 0.0
  %232 = vmatpush.msra.mxu0 %v20
  %233 = vmatmul.f32.gmra.mxu0 %v215
  %v234 = vpop.f32.mrf.mxu0
  %v235 = vadd.f32 0.0, %v234
  %236 = vdwg.mxu0
  %v237 = vsel %vm182, %v208, 0
  %239 = vmatpush.msra.mxu0 0.0
  %240 = vmatpush.msra.mxu0 0.0
  %241 = vmatpush.msra.mxu0 0.0
  %242 = vmatpush.msra.mxu0 0.0
  %243 = vmatpush.msra.mxu0 0.0
  %244 = vmatpush.msra.mxu0 0.0
  %245 = vmatpush.msra.mxu0 0.0
  %246 = vmatpush.msra.mxu0 0.0
  %247 = vmatpush.msra.mxu0 0.0
  %248 = vmatpush.msra.mxu0 0.0
  %249 = vmatpush.msra.mxu0 0.0
  %250 = vmatpush.msra.mxu0 0.0
  %251 = vmatpush.msra.mxu0 0.0
  %252 = vmatpush.msra.mxu0 0.0
  %253 = vmatpush.msra.mxu0 0.0
  %254 = vmatpush.msra.mxu0 %v21
  %255 = vmatmul.f32.gmra.mxu0 %v237
  %v256 = vpop.f32.mrf.mxu0
  %v257 = vadd.f32 0.0, %v256
  %258 = vdwg.mxu0
  %v259 = vsel %vm182, %v209, 0
  %261 = vmatpush.msra.mxu0 0.0
  %262 = vmatpush.msra.mxu0 0.0
  %263 = vmatpush.msra.mxu0 0.0
  %264 = vmatpush.msra.mxu0 0.0
  %265 = vmatpush.msra.mxu0 0.0
  %266 = vmatpush.msra.mxu0 0.0
  %267 = vmatpush.msra.mxu0 0.0
  %268 = vmatpush.msra.mxu0 0.0
  %269 = vmatpush.msra.mxu0 0.0
  %270 = vmatpush.msra.mxu0 0.0
  %271 = vmatpush.msra.mxu0 0.0
  %272 = vmatpush.msra.mxu0 0.0
  %273 = vmatpush.msra.mxu0 0.0
  %274 = vmatpush.msra.mxu0 0.0
  %275 = vmatpush.msra.mxu0 0.0
  %276 = vmatpush.msra.mxu0 %v22
  %277 = vmatmul.f32.gmra.mxu0 %v259
  %v278 = vpop.f32.mrf.mxu0
  %v279 = vadd.f32 0.0, %v278
  %280 = vdwg.mxu0
  %v281 = vsel %vm182, %v210, 0
  %283 = vmatpush.msra.mxu0 0.0
  %284 = vmatpush.msra.mxu0 0.0
  %285 = vmatpush.msra.mxu0 0.0
  %286 = vmatpush.msra.mxu0 0.0
  %287 = vmatpush.msra.mxu0 0.0
  %288 = vmatpush.msra.mxu0 0.0
  %289 = vmatpush.msra.mxu0 0.0
  %290 = vmatpush.msra.mxu0 0.0
  %291 = vmatpush.msra.mxu0 0.0
  %292 = vmatpush.msra.mxu0 0.0
  %293 = vmatpush.msra.mxu0 0.0
  %294 = vmatpush.msra.mxu0 0.0
  %295 = vmatpush.msra.mxu0 0.0
  %296 = vmatpush.msra.mxu0 0.0
  %297 = vmatpush.msra.mxu0 0.0
  %298 = vmatpush.msra.mxu0 %v23
  %299 = vmatmul.f32.gmra.mxu0 %v281
  %v300 = vpop.f32.mrf.mxu0
  %v301 = vadd.f32 0.0, %v300
  %302 = vdwg.mxu0
  %v303 = vsel %vm182, %v211, 0
  %305 = vmatpush.msra.mxu0 0.0
  %306 = vmatpush.msra.mxu0 0.0
  %307 = vmatpush.msra.mxu0 0.0
  %308 = vmatpush.msra.mxu0 0.0
  %309 = vmatpush.msra.mxu0 0.0
  %310 = vmatpush.msra.mxu0 0.0
  %311 = vmatpush.msra.mxu0 0.0
  %312 = vmatpush.msra.mxu0 0.0
  %313 = vmatpush.msra.mxu0 0.0
  %314 = vmatpush.msra.mxu0 0.0
  %315 = vmatpush.msra.mxu0 0.0
  %316 = vmatpush.msra.mxu0 0.0
  %317 = vmatpush.msra.mxu0 0.0
  %318 = vmatpush.msra.mxu0 0.0
  %319 = vmatpush.msra.mxu0 0.0
  %320 = vmatpush.msra.mxu0 %v24
  %321 = vmatmul.f32.gmra.mxu0 %v303
  %v322 = vpop.f32.mrf.mxu0
  %v323 = vadd.f32 0.0, %v322
  %324 = vdwg.mxu0
  %v325 = vsel %vm182, %v212, 0
  %327 = vmatpush.msra.mxu0 0.0
  %328 = vmatpush.msra.mxu0 0.0
  %329 = vmatpush.msra.mxu0 0.0
  %330 = vmatpush.msra.mxu0 0.0
  %331 = vmatpush.msra.mxu0 0.0
  %332 = vmatpush.msra.mxu0 0.0
  %333 = vmatpush.msra.mxu0 0.0
  %334 = vmatpush.msra.mxu0 0.0
  %335 = vmatpush.msra.mxu0 0.0
  %336 = vmatpush.msra.mxu0 0.0
  %337 = vmatpush.msra.mxu0 0.0
  %338 = vmatpush.msra.mxu0 0.0
  %339 = vmatpush.msra.mxu0 0.0
  %340 = vmatpush.msra.mxu0 0.0
  %341 = vmatpush.msra.mxu0 0.0
  %342 = vmatpush.msra.mxu0 %v25
  %343 = vmatmul.f32.gmra.mxu0 %v325
  %v344 = vpop.f32.mrf.mxu0
  %v345 = vadd.f32 0.0, %v344
  %346 = vdwg.mxu0
  %v347 = vsel %vm182, %v213, 0
  %349 = vmatpush.msra.mxu0 0.0
  %350 = vmatpush.msra.mxu0 0.0
  %351 = vmatpush.msra.mxu0 0.0
  %352 = vmatpush.msra.mxu0 0.0
  %353 = vmatpush.msra.mxu0 0.0
  %354 = vmatpush.msra.mxu0 0.0
  %355 = vmatpush.msra.mxu0 0.0
  %356 = vmatpush.msra.mxu0 0.0
  %357 = vmatpush.msra.mxu0 0.0
  %358 = vmatpush.msra.mxu0 0.0
  %359 = vmatpush.msra.mxu0 0.0
  %360 = vmatpush.msra.mxu0 0.0
  %361 = vmatpush.msra.mxu0 0.0
  %362 = vmatpush.msra.mxu0 0.0
  %363 = vmatpush.msra.mxu0 0.0
  %364 = vmatpush.msra.mxu0 %v26
  %365 = vmatmul.f32.gmra.mxu0 %v347
  %v366 = vpop.f32.mrf.mxu0
  %v367 = vadd.f32 0.0, %v366
  %368 = vdwg.mxu0
  %v369 = vsel %vm182, %v214, 0
  %371 = vmatpush.msra.mxu0 0.0
  %372 = vmatpush.msra.mxu0 0.0
  %373 = vmatpush.msra.mxu0 0.0
  %374 = vmatpush.msra.mxu0 0.0
  %375 = vmatpush.msra.mxu0 0.0
  %376 = vmatpush.msra.mxu0 0.0
  %377 = vmatpush.msra.mxu0 0.0
  %378 = vmatpush.msra.mxu0 0.0
  %379 = vmatpush.msra.mxu0 0.0
  %380 = vmatpush.msra.mxu0 0.0
  %381 = vmatpush.msra.mxu0 0.0
  %382 = vmatpush.msra.mxu0 0.0
  %383 = vmatpush.msra.mxu0 0.0
  %384 = vmatpush.msra.mxu0 0.0
  %385 = vmatpush.msra.mxu0 0.0
  %386 = vmatpush.msra.mxu0 %v27
  %387 = vmatmul.f32.gmra.mxu0 %v369
  %v388 = vpop.f32.mrf.mxu0
  %v389 = vadd.f32 0.0, %v388
  %390 = vdwg.mxu0
  %v399 = vrot.slane %v257, 7
  %v400 = vsel %vm166, %v399, %v235
  %v401 = vrot.slane %v279, 6
  %v402 = vsel %vm168, %v401, %v400
  %v403 = vrot.slane %v301, 5
  %v404 = vsel %vm170, %v403, %v402
  %v405 = vrot.slane %v323, 4
  %v406 = vsel %vm172, %v405, %v404
  %v407 = vrot.slane %v345, 3
  %v408 = vsel %vm174, %v407, %v406
  %v409 = vrot.slane %v367, 2
  %v410 = vsel %vm176, %v409, %v408
  %v411 = vrot.slane %v389, 1
  %v412 = vsel %vm178, %v411, %v410
  %414 = vst.msk [vmem:[%s5] sm:$0xff] %vm36, %v412
  // Predicated region
  $region22: #{attention_forward.1} parent=0 // pred_check
    _
  $region23: #{attention_forward.1} parent=0 // pred_check_branch
    %416 = sbr.rel (0) target = $region25
  $region24: #{attention_forward.1} parent=0 // pred_region
    _
  $region25: #{attention_forward.1} parent=0 // pred_fallthru
    _
  // Predicated region
  $region26: #{attention_forward.1} parent=0 // pred_check
    _
  $region27: #{attention_forward.1} parent=0 // pred_check_branch
    %418 = sbr.rel (0) target = $region29
  $region28: #{attention_forward.1} parent=0 // pred_region
    _
  $region29: #{attention_forward.1} parent=0 // pred_fallthru
    _

</llo_original>
